<compile_context>
chip_gen: v7x
topology: tpu7x:2x2x1
jax: 0.10.0
libtpu: 0.0.40
codegen_flags: <defaults>
</compile_context>

<pallas_src>
import functools

import jax
import jax.numpy as jnp
from jax import lax
from jax.experimental import pallas as pl
from jax.experimental.pallas import tpu as pltpu


def _round_up(x, m):
    return ((x + m - 1) // m) * m


def _bf16_epilogue_supported():
    """bf16 VPU/EUP exists on v6e / v7x; not on v5e and earlier. Default to f32."""
    try:
        kind = jax.devices()[0].device_kind.lower()
    except Exception:
        return False
    return ("v6" in kind) or ("v7" in kind) or ("trillium" in kind)


def mlp_critic_kernel(x_ref, w1_ref, b1_ref, w2_ref, b2_ref, w3_ref, b3_ref,
                      out_ref, *, bf16_epilogue):
    # Shapes:
    #   x_ref : (TILE_B, obs_dim) f32   (native obs layout, straight from HBM)
    #   w1_ref: (h1, obs_dim) bf16      b1_ref: (h1, 1) f32
    #   w2_ref: (h2, h1)     bf16       b2_ref: (h2, 1) f32
    #   w3_ref: (h2, 1)      f32        b3_ref: (1,)    f32 (SMEM scalar)
    #   out_ref: (1, TILE_B) f32        (lane-dense output slab)
    x = x_ref[...].astype(jnp.bfloat16)

    # Layer 1: contract obs_dim of both operands -> (h1, TILE_B), batch on lanes.
    # bf16 MXU matmul with f32 accumulation; any operand reorientation lands on
    # the otherwise-idle XLU.
    dn = (((1,), (1,)), ((), ()))
    h = lax.dot_general(w1_ref[...], x, dn, preferred_element_type=jnp.float32)
    h = h + b1_ref[...]
    if bf16_epilogue:
        h = jnp.tanh(h.astype(jnp.bfloat16))            # bf16 EUP tanh (v6e/v7x)
    else:
        h = jnp.tanh(h).astype(jnp.bfloat16)             # f32 tanh (v5e has no bf16 EUP)

    # Layer 2: (h2, h1) @ (h1, TILE_B) -> (h2, TILE_B).
    h = jnp.dot(w2_ref[...], h, preferred_element_type=jnp.float32)
    h = h + b2_ref[...]
    if bf16_epilogue:
        h = jnp.tanh(h.astype(jnp.bfloat16))
    else:
        h = jnp.tanh(h)

    # Output layer (Identity activation), width 1: keep it off the MXU.
    # VPU multiply + cross-sublane XLU reduce -> lane-dense (1, TILE_B).
    v = jnp.sum(h.astype(jnp.float32) * w3_ref[...], axis=0, keepdims=True) + b3_ref[0]
    out_ref[...] = v.astype(out_ref.dtype)


def mlp_critic_forward(obs, params, *, tile_b=8192, bf16_epilogue=None):
    """obs: [B, obs_dim] float32. Returns value estimates [B] float32."""
    (w1, b1), (w2, b2), (w3, b3) = params
    B, obs_dim = obs.shape
    h1 = w1.shape[0]
    h2 = w2.shape[0]

    if bf16_epilogue is None:
        bf16_epilogue = _bf16_epilogue_supported()

    # --- Batch tiling -------------------------------------------------------
    # Small B: a single full-array tile (block == full dims satisfies the
    # (8,128) rule without any padding). Large B: lane-aligned tiles of up to
    # `tile_b`, with >= 2 grid steps so v7x can use both TensorCores.
    if B <= tile_b and B < 4096:
        TILE_B = B
        B_pad = B
    else:
        TILE_B = min(_round_up(tile_b, 128), _round_up(pl.cdiv(B, 2), 128))
        TILE_B = max(TILE_B, 128)
        B_pad = _round_up(B, TILE_B)
    grid = (B_pad // TILE_B,)

    # Only pad when B is not a multiple of TILE_B (common RL batch sizes need none).
    x_in = obs if B_pad == B else jnp.pad(obs, ((0, B_pad - B), (0, 0)))

    # Weights are tiny: a one-time bf16 cast is negligible; obs stays untouched.
    w1b = w1.astype(jnp.bfloat16)
    w2b = w2.astype(jnp.bfloat16)

    # VMEM budget: double-buffered obs tile (lane-padded), double-buffered output
    # row, plus the (h, TILE_B) intermediates; clamp safely under every chip's
    # physical VMEM (v7x: 64 MiB per TC) while exceeding v5e's 16 MiB default.
    per_tile_bytes = (2 * TILE_B * max(obs_dim, 128) * 4      # obs double buffer
                      + 2 * 8 * TILE_B * 4                    # output double buffer
                      + 8 * max(h1, h2) * TILE_B * 4)         # intermediates (headroom)
    vmem_limit = int(min(50 * 1024 * 1024, max(32 * 1024 * 1024, 2 * per_tile_bytes)))

    cost = pl.CostEstimate(
        flops=2 * B * (obs_dim * h1 + h1 * h2 + h2),
        transcendentals=B * (h1 + h2),
        bytes_accessed=(B * obs_dim * 4 + B * 4
                        + w1b.size * 2 + w2b.size * 2
                        + (b1.size + b2.size + w3.size + b3.size) * 4),
    )

    kernel = functools.partial(mlp_critic_kernel, bf16_epilogue=bf16_epilogue)

    out = pl.pallas_call(
        kernel,
        out_shape=jax.ShapeDtypeStruct((1, B_pad), jnp.float32),
        grid=grid,
        in_specs=[
            pl.BlockSpec((TILE_B, obs_dim), lambda i: (i, 0)),   # obs tile (pipelined)
            pl.BlockSpec((h1, obs_dim), lambda i: (0, 0)),       # w1 (VMEM-resident)
            pl.BlockSpec((h1, 1), lambda i: (0, 0)),             # b1
            pl.BlockSpec((h2, h1), lambda i: (0, 0)),            # w2
            pl.BlockSpec((h2, 1), lambda i: (0, 0)),             # b2
            pl.BlockSpec((h2, 1), lambda i: (0, 0)),             # w3 (column for VPU/XLU path)
            pl.BlockSpec(memory_space=pltpu.MemorySpace.SMEM),   # b3 scalar
        ],
        out_specs=pl.BlockSpec((1, TILE_B), lambda i: (0, i)),   # lane-dense output
        compiler_params=pltpu.CompilerParams(
            dimension_semantics=("parallel",),
            vmem_limit_bytes=vmem_limit,
        ),
        cost_estimate=cost,
    )(x_in, w1b, b1, w2b, b2, w3, b3)

    # torch.squeeze(v, -1): drop batch padding (if any), return [B].
    return out[0, :B]


def init_params(key, obs_dim, hidden_sizes):
    """nn.Linear default init U(-1/sqrt(fan_in), 1/sqrt(fan_in)).

    Weights stay in PyTorch's (out_features, in_features) layout, biases as
    (out_features, 1) columns; the final layer's weight is stored as a (h2, 1)
    column and its bias as a (1,) scalar (it lands in SMEM inside the kernel).
    """
    sizes = [obs_dim] + list(hidden_sizes) + [1]
    raw = []
    for i in range(len(sizes) - 1):
        fan_in, fan_out = sizes[i], sizes[i + 1]
        key, kw, kb = jax.random.split(key, 3)
        bound = 1.0 / jnp.sqrt(fan_in)
        w = jax.random.uniform(kw, (fan_out, fan_in), jnp.float32, -bound, bound)
        b = jax.random.uniform(kb, (fan_out, 1), jnp.float32, -bound, bound)
        raw.append((w, b))
    (w1, b1), (w2, b2), (w3, b3) = raw
    return [(w1, b1), (w2, b2), (jnp.transpose(w3), b3.reshape(1))]


def reference_forward_f32(obs, params):
    """Pure-f32 JAX reference (matches the PyTorch module numerics)."""
    (w1, b1), (w2, b2), (w3, b3) = params
    h = jnp.tanh(obs @ w1.T + b1[:, 0])
    h = jnp.tanh(h @ w2.T + b2[:, 0])
    v = h @ w3 + b3
    return jnp.squeeze(v, axis=-1)


def reference_forward_kernel_matched(obs, params, bf16_epilogue):
    """Reference mirroring the kernel's bf16-matmul / f32-accumulate numerics."""
    (w1, b1), (w2, b2), (w3, b3) = params
    x = obs.astype(jnp.bfloat16)
    h = jnp.dot(x, w1.astype(jnp.bfloat16).T,
                preferred_element_type=jnp.float32) + b1[:, 0]
    h = jnp.tanh(h.astype(jnp.bfloat16)) if bf16_epilogue else jnp.tanh(h).astype(jnp.bfloat16)
    h = jnp.dot(h, w2.astype(jnp.bfloat16).T,
                preferred_element_type=jnp.float32) + b2[:, 0]
    h = jnp.tanh(h.astype(jnp.bfloat16)) if bf16_epilogue else jnp.tanh(h)
    v = h.astype(jnp.float32) @ w3 + b3
    return jnp.squeeze(v, axis=-1)


if __name__ == "__main__":
    key = jax.random.PRNGKey(0)
    batch, obs_dim, hidden_sizes = 8, 16, (32, 32)

    key, k_obs, k_params = jax.random.split(key, 3)
    obs = jax.random.normal(k_obs, (batch, obs_dim), jnp.float32)
    params = init_params(k_params, obs_dim, hidden_sizes)

    bf16_epi = _bf16_epilogue_supported()
    forward = jax.jit(lambda o, p: mlp_critic_forward(o, p, bf16_epilogue=bf16_epi))
    v = forward(obs, params)
    jax.block_until_ready(v)

    assert v.shape == (batch,), f"bad output shape {v.shape}"
    v_ref_matched = reference_forward_kernel_matched(obs, params, bf16_epi)
    v_ref_f32 = reference_forward_f32(obs, params)
    assert jnp.allclose(v, v_ref_matched, atol=1e-2, rtol=1e-2), \
        "mismatch vs kernel-matched reference"
    assert jnp.allclose(v, v_ref_f32, atol=5e-2, rtol=5e-2), \
        "mismatch vs f32 reference"

    print("KERNEL_OK")
</pallas_src>

<mosaic_0001>
module attributes {stable_mosaic.version = 11 : i64} {
  func.func @mlp_critic_kernel(%arg0: i32, %arg1: memref<8x16xf32, #tpu.memory_space<vmem>>, %arg2: memref<32x16xbf16, #tpu.memory_space<vmem>>, %arg3: memref<32x1xf32, #tpu.memory_space<vmem>>, %arg4: memref<32x32xbf16, #tpu.memory_space<vmem>>, %arg5: memref<32x1xf32, #tpu.memory_space<vmem>>, %arg6: memref<32x1xf32, #tpu.memory_space<vmem>>, %arg7: memref<1xf32, #tpu.memory_space<smem>>, %arg8: memref<1x8xf32, #tpu.memory_space<vmem>>) attributes {dimension_semantics = [#tpu.dimension_semantics<parallel>], iteration_bounds = array<i64: 1>, scalar_prefetch = 0 : i64, scratch_operands = 0 : i64, tpu.core_type = #tpu.core_type<tc>, window_params = [{transform_indices = @transform_0, window_bounds = array<i64: 8, 16>}, {pipeline_mode = #tpu.pipeline_mode<synchronous>, transform_indices = @transform_1, window_bounds = array<i64: 32, 16>}, {pipeline_mode = #tpu.pipeline_mode<synchronous>, transform_indices = @transform_2, window_bounds = array<i64: 32, 1>}, {pipeline_mode = #tpu.pipeline_mode<synchronous>, transform_indices = @transform_3, window_bounds = array<i64: 32, 32>}, {pipeline_mode = #tpu.pipeline_mode<synchronous>, transform_indices = @transform_4, window_bounds = array<i64: 32, 1>}, {pipeline_mode = #tpu.pipeline_mode<synchronous>, transform_indices = @transform_5, window_bounds = array<i64: 32, 1>}, {transform_indices = @transform_6, window_bounds = array<i64: 1>}, {transform_indices = @transform_7, window_bounds = array<i64: 1, 8>}]} {
    %c0 = arith.constant 0 : index
    %c0_0 = arith.constant 0 : index
    %0 = vector.load %arg1[%c0, %c0_0] : memref<8x16xf32, #tpu.memory_space<vmem>>, vector<8x16xf32>
    %1 = arith.truncf %0 : vector<8x16xf32> to vector<8x16xbf16>
    %c0_1 = arith.constant 0 : index
    %c0_2 = arith.constant 0 : index
    %2 = vector.load %arg2[%c0_1, %c0_2] : memref<32x16xbf16, #tpu.memory_space<vmem>>, vector<32x16xbf16>
    %cst = arith.constant dense<0.000000e+00> : vector<32x8xf32>
    %3 = tpu.matmul %2, %1, %cst {dimension_numbers = #tpu.dot_dimension_numbers<[1], [1], [0], [0], [0, 0, 1, 0], [], []>} : vector<32x16xbf16>, vector<8x16xbf16>, vector<32x8xf32> -> vector<32x8xf32>
    %c0_3 = arith.constant 0 : index
    %c0_4 = arith.constant 0 : index
    %4 = vector.load %arg3[%c0_3, %c0_4] : memref<32x1xf32, #tpu.memory_space<vmem>>, vector<32x1xf32>
    %5 = vector.broadcast %4 : vector<32x1xf32> to vector<32x8xf32>
    %6 = arith.addf %3, %5 : vector<32x8xf32>
    %7 = math.tanh %6 : vector<32x8xf32>
    %8 = arith.truncf %7 : vector<32x8xf32> to vector<32x8xbf16>
    %c0_5 = arith.constant 0 : index
    %c0_6 = arith.constant 0 : index
    %9 = vector.load %arg4[%c0_5, %c0_6] : memref<32x32xbf16, #tpu.memory_space<vmem>>, vector<32x32xbf16>
    %cst_7 = arith.constant dense<0.000000e+00> : vector<32x8xf32>
    %10 = tpu.matmul %9, %8, %cst_7 {dimension_numbers = #tpu.dot_dimension_numbers<[1], [0], [0], [1], [0, 0, 1, 1], [], []>} : vector<32x32xbf16>, vector<32x8xbf16>, vector<32x8xf32> -> vector<32x8xf32>
    %c0_8 = arith.constant 0 : index
    %c0_9 = arith.constant 0 : index
    %11 = vector.load %arg5[%c0_8, %c0_9] : memref<32x1xf32, #tpu.memory_space<vmem>>, vector<32x1xf32>
    %12 = vector.broadcast %11 : vector<32x1xf32> to vector<32x8xf32>
    %13 = arith.addf %10, %12 : vector<32x8xf32>
    %14 = math.tanh %13 : vector<32x8xf32>
    %c0_10 = arith.constant 0 : index
    %c0_11 = arith.constant 0 : index
    %15 = vector.load %arg6[%c0_10, %c0_11] : memref<32x1xf32, #tpu.memory_space<vmem>>, vector<32x1xf32>
    %16 = vector.broadcast %15 : vector<32x1xf32> to vector<32x8xf32>
    %17 = arith.mulf %14, %16 : vector<32x8xf32>
    %cst_12 = arith.constant dense<0.000000e+00> : vector<8xf32>
    %18 = vector.multi_reduction <add>, %17, %cst_12 [0] : vector<32x8xf32> to vector<8xf32>
    %19 = vector.shape_cast %18 : vector<8xf32> to vector<1x8xf32>
    %c0_13 = arith.constant 0 : index
    %20 = memref.load %arg7[%c0_13] : memref<1xf32, #tpu.memory_space<smem>>
    %21 = vector.broadcast %20 : f32 to vector<1x8xf32>
    %22 = arith.addf %19, %21 : vector<1x8xf32>
    %c0_14 = arith.constant 0 : index
    %c0_15 = arith.constant 0 : index
    %23 = vector.load %arg8[%c0_14, %c0_15] : memref<1x8xf32, #tpu.memory_space<vmem>>, vector<1x8xf32>
    tpu.vector_store %arg8[%c0_14, %c0_15], %22 {strides = array<i32>} : memref<1x8xf32, #tpu.memory_space<vmem>>, vector<1x8xf32>,
    return
  }
  func.func @transform_0(%arg0: i32) -> (i32, i32) {
    %c0_i32 = arith.constant 0 : i32
    %c0_i32_0 = arith.constant 0 : i32
    return %arg0, %c0_i32 : i32, i32
  }
  func.func @transform_1(%arg0: i32) -> (i32, i32) {
    %c0_i32 = arith.constant 0 : i32
    %c0_i32_0 = arith.constant 0 : i32
    %c0_i32_1 = arith.constant 0 : i32
    return %c0_i32, %c0_i32_0 : i32, i32
  }
  func.func @transform_2(%arg0: i32) -> (i32, i32) {
    %c0_i32 = arith.constant 0 : i32
    %c0_i32_0 = arith.constant 0 : i32
    %c0_i32_1 = arith.constant 0 : i32
    return %c0_i32, %c0_i32_0 : i32, i32
  }
  func.func @transform_3(%arg0: i32) -> (i32, i32) {
    %c0_i32 = arith.constant 0 : i32
    %c0_i32_0 = arith.constant 0 : i32
    %c0_i32_1 = arith.constant 0 : i32
    return %c0_i32, %c0_i32_0 : i32, i32
  }
  func.func @transform_4(%arg0: i32) -> (i32, i32) {
    %c0_i32 = arith.constant 0 : i32
    %c0_i32_0 = arith.constant 0 : i32
    %c0_i32_1 = arith.constant 0 : i32
    return %c0_i32, %c0_i32_0 : i32, i32
  }
  func.func @transform_5(%arg0: i32) -> (i32, i32) {
    %c0_i32 = arith.constant 0 : i32
    %c0_i32_0 = arith.constant 0 : i32
    %c0_i32_1 = arith.constant 0 : i32
    return %c0_i32, %c0_i32_0 : i32, i32
  }
  func.func @transform_6(%arg0: i32) -> i32 {
    %c0_i32 = arith.constant 0 : i32
    %c0_i32_0 = arith.constant 0 : i32
    return %c0_i32 : i32
  }
  func.func @transform_7(%arg0: i32) -> (i32, i32) {
    %c0_i32 = arith.constant 0 : i32
    %c0_i32_0 = arith.constant 0 : i32
    return %c0_i32, %arg0 : i32, i32
  }
}

</mosaic_0001>

<llo_original>
// kernel: _lambda_.1
$region0: #{_lambda_.1}
  #allocation0 [shape = 'u32[]', space=smem, size = 0x4, offset = 0x4, fixed_abs, tag = 'smem constant byte address 0x4 - core index']
  #allocation1 [shape = 'u32[144,128]{1,0:T(1,128)}', space=vmem, size = 0x12000, scoped, tag = 'internal scratch']
  #allocation2 [shape = 'f32[1]{0:T(128)S(6)}', space=smem, size = 0x200, scoped, tag = 'scoped memory for _lambda_.1']
  %s0 = inlined_call_operand.vmem [shape: f32[8,16], index: 0, kind: input, shape index: {}]
  %s1 = inlined_call_operand.vmem [shape: bf16[32,16], index: 1, kind: input, shape index: {}]
  %s2 = inlined_call_operand.vmem [shape: f32[32,1], index: 2, kind: input, shape index: {}]
  %s3 = inlined_call_operand.vmem [shape: bf16[32,32], index: 3, kind: input, shape index: {}]
  %s4 = inlined_call_operand.vmem [shape: f32[32,1], index: 4, kind: input, shape index: {}]
  %s5 = inlined_call_operand.vmem [shape: f32[32,1], index: 5, kind: input, shape index: {}]
  %s6 = inlined_call_operand.<no memory space> [shape: f32[1], index: 6, kind: input, shape index: {}]
  %s7 = inlined_call_operand.hbm [shape: f32[1,8], index: 7, kind: output, shape index: {}]
  %s8 = sld [smem:[#allocation0]]
  $region38: #{_lambda_.1} parent=0
    _
  %s10 = ssub.s32 1, %s8
  %s11 = scalar_select 0, %s10, %s8
  %12 = sst [smem:[#allocation2]] %s6
  $region1: #{_lambda_.1} parent=0
    #allocation3 [shape = 'u8[512]{0}', space=vmem, size = 0x400, scoped, tag = 'output window, operand 0, single buffered']
    #allocation4 [shape = 's32[1]{0}', space=sflag, size = 0x4, scoped, tag = 'scoped memory for _lambda_.1']
    %13 = vsyncpa [#allocation4], 0
    // Predicated region
    $region2: #{_lambda_.1} parent=1 // pred_check
      _
    $region3: #{_lambda_.1} parent=1 // pred_check_branch
      %15 = sbr.rel (0) target = $region5
    $region4: #{_lambda_.1} parent=1 // pred_region
      _
    $region5: #{_lambda_.1} parent=1 // pred_fallthru
      _
    // Predicated region
    $region6: #{_lambda_.1} parent=1 // pred_check
      _
    $region7: #{_lambda_.1} parent=1 // pred_check_branch
      %17 = sbr.rel (0) target = $region9
    $region8: #{_lambda_.1} parent=1 // pred_region
      _
    $region9: #{_lambda_.1} parent=1 // pred_fallthru
      _
    // Predicated region
    $region10: #{_lambda_.1} parent=1 // pred_check
      _
    $region11: #{_lambda_.1} parent=1 // pred_check_branch
      %19 = sbr.rel (0) target = $region13
    $region12: #{_lambda_.1} parent=1 // pred_region
      _
    $region13: #{_lambda_.1} parent=1 // pred_fallthru
      _
    // Predicated region
    $region14: #{_lambda_.1} parent=1 // pred_check
      _
    $region15: #{_lambda_.1} parent=1 // pred_check_branch
      %21 = sbr.rel (0) target = $region17
    $region16: #{_lambda_.1} parent=1 // pred_region
      _
    $region17: #{_lambda_.1} parent=1 // pred_fallthru
      _
    // Predicated region
    $region18: #{_lambda_.1} parent=1 // pred_check
      _
    $region19: #{_lambda_.1} parent=1 // pred_check_branch
      %23 = sbr.rel (0) target = $region21
    $region20: #{_lambda_.1} parent=1 // pred_region
      _
    $region21: #{_lambda_.1} parent=1 // pred_fallthru
      _
    // Predicated region
    $region22: #{_lambda_.1} parent=1 // pred_check
      _
    $region23: #{_lambda_.1} parent=1 // pred_check_branch
      %25 = sbr.rel (0) target = $region25
    $region24: #{_lambda_.1} parent=1 // pred_region
      _
    $region25: #{_lambda_.1} parent=1 // pred_fallthru
      _
    // Predicated region
    $region26: #{_lambda_.1} parent=1 // pred_check
      _
    $region27: #{_lambda_.1} parent=1 // pred_check_branch
      %27 = sbr.rel (0) target = $region29
    $region28: #{_lambda_.1} parent=1 // pred_region
      _
    $region29: #{_lambda_.1} parent=1 // pred_fallthru
      _
    %v29 = vld [vmem:[%s0] sm:$0xff]
    %v30 = vpack.c.bf16 %v29, %v29
    %v31 = vld [vmem:[%s1] sm:$0xf]
    %v32 = vld [vmem:[%s1 + $0x4] sm:$0xf]
    %v33 = vld [vmem:[%s1 + $0x8] sm:$0xf]
    %v34 = vld [vmem:[%s1 + $0xc] sm:$0xf]
    %v35 = vld [vmem:[%s2] sm:$0xff]
    %v36 = vld [vmem:[%s2 + $0x8] sm:$0xff]
    %v37 = vld [vmem:[%s2 + $0x10] sm:$0xff]
    %v38 = vld [vmem:[%s2 + $0x18] sm:$0xff]
    %40 = vset.pattern.permute.xlu0 0
    %41 = vperm.xlu0 %40, %v35
    %v42 = vpop.permute.xlu0 %41
    %45 = vset.pattern.permute.xlu0 0
    %46 = vperm.xlu0 %45, %v36
    %v47 = vpop.permute.xlu0 %46
    %50 = vset.pattern.permute.xlu0 0
    %51 = vperm.xlu0 %50, %v37
    %v52 = vpop.permute.xlu0 %51
    %55 = vset.pattern.permute.xlu0 0
    %56 = vperm.xlu0 %55, %v38
    %v57 = vpop.permute.xlu0 %56
    %v63 = vunpack.c.l.b16 %v31
    %v64 = vunpack.c.l.b16 %v32
    %v65 = vunpack.c.l.b16 %v33
    %v66 = vunpack.c.l.b16 %v34
    %v67 = vpack.c.b16 %v64, %v63
    %v68 = vpack.c.b16 %v66, %v65
    %vm69 = vcmask 130048
    %v71 = vsel %vm69, %v67, 0
    %v74 = vsel %vm69, %v68, 0
    %v77 = vsel %vm69, %v30, 0
    %79 = vmatprep.subr.bf16.mxu0 0
    %80 = vmatpush1.bf16.xpose.msra.mxu0 %v77
    %81 = vmatprep.subr.bf16.mxu0 0
    %82 = vmatpush1.bf16.xpose.msra.mxu0 0
    %83 = vmatprep.subr.bf16.mxu0 0
    %84 = vmatpush1.bf16.xpose.msra.mxu0 0
    %85 = vmatprep.subr.bf16.mxu0 0
    %86 = vmatpush1.bf16.xpose.msra.mxu0 0
    %87 = vmatprep.subr.bf16.mxu0 0
    %88 = vmatpush1.bf16.xpose.msra.mxu0 0
    %89 = vmatprep.subr.bf16.mxu0 0
    %90 = vmatpush1.bf16.xpose.msra.mxu0 0
    %91 = vmatprep.subr.bf16.mxu0 0
    %92 = vmatpush1.bf16.xpose.msra.mxu0 0
    %93 = vmatprep.subr.bf16.mxu0 0
    %94 = vmatpush1.bf16.xpose.msra.mxu0 0
    %95 = vmatprep.subr.bf16.mxu0 0
    %96 = vmatpush1.bf16.xpose.msra.mxu0 0
    %97 = vmatprep.subr.bf16.mxu0 0
    %98 = vmatpush1.bf16.xpose.msra.mxu0 0
    %99 = vmatprep.subr.bf16.mxu0 0
    %100 = vmatpush1.bf16.xpose.msra.mxu0 0
    %101 = vmatprep.subr.bf16.mxu0 0
    %102 = vmatpush1.bf16.xpose.msra.mxu0 0
    %103 = vmatprep.subr.bf16.mxu0 0
    %104 = vmatpush1.bf16.xpose.msra.mxu0 0
    %105 = vmatprep.subr.bf16.mxu0 0
    %106 = vmatpush1.bf16.xpose.msra.mxu0 0
    %107 = vmatprep.subr.bf16.mxu0 0
    %108 = vmatpush1.bf16.xpose.msra.mxu0 0
    %109 = vmatprep.subr.bf16.mxu0 0
    %110 = vmatpush1.bf16.xpose.msra.mxu0 0
    %111 = vmatprep.mubr.bf16.mxu0 0
    %112 = vmatmul.mubr.bf16.gmra.mrb[0].mxu0 %v71
    %v113 = vpop.f32.mrb[0].mxu0
    %v114 = vadd.f32 %v42, %v113
    %v115 = vpop.f32.mrb[0].mxu0
    %v116 = vpop.f32.mrb[0].mxu0
    %v117 = vadd.f32 %v47, %v116
    %v118 = vpop.f32.mrb[0].mxu0
    %119 = vmatprep.mubr.bf16.mxu0 0
    %120 = vmatmul.mubr.bf16.gmra.mrb[0].mxu0 %v74
    %v121 = vpop.f32.mrb[0].mxu0
    %v122 = vadd.f32 %v52, %v121
    %v123 = vpop.f32.mrb[0].mxu0
    %v124 = vpop.f32.mrb[0].mxu0
    %v125 = vadd.f32 %v57, %v124
    %v126 = vpop.f32.mrb[0].mxu0
    %127 = vdwg.mxu0
    %v128 = vtanh.pop %v114
    %v129 = vtanh.pop %v117
    %v130 = vtanh.pop %v122
    %v131 = vtanh.pop %v125
    %v132 = vpack.c.bf16 %v129, %v128
    %v133 = vpack.c.bf16 %v131, %v130
    %v134 = vld [vmem:[%s3] sm:$0xf]
    %v135 = vld [vmem:[%s3 + $0x4] sm:$0xf]
    %v136 = vld [vmem:[%s3 + $0x8] sm:$0xf]
    %v137 = vld [vmem:[%s3 + $0xc] sm:$0xf]
    %v138 = vld [vmem:[%s4] sm:$0xff]
    %v139 = vld [vmem:[%s4 + $0x8] sm:$0xff]
    %v140 = vld [vmem:[%s4 + $0x10] sm:$0xff]
    %v141 = vld [vmem:[%s4 + $0x18] sm:$0xff]
    %143 = vset.pattern.permute.xlu0 0
    %144 = vperm.xlu0 %143, %v138
    %v145 = vpop.permute.xlu0 %144
    %148 = vset.pattern.permute.xlu0 0
    %149 = vperm.xlu0 %148, %v139
    %v150 = vpop.permute.xlu0 %149
    %153 = vset.pattern.permute.xlu0 0
    %154 = vperm.xlu0 %153, %v140
    %v155 = vpop.permute.xlu0 %154
    %158 = vset.pattern.permute.xlu0 0
    %159 = vperm.xlu0 %158, %v141
    %v160 = vpop.permute.xlu0 %159
    %v166 = vunpack.c.l.b16 %v134
    %v167 = vunpack.c.l.b16 %v135
    %v168 = vunpack.c.l.b16 %v136
    %v169 = vunpack.c.l.b16 %v137
    %v170 = vpack.c.b16 %v167, %v166
    %v171 = vpack.c.b16 %v169, %v168
    %vm172 = vcmask 261120
    %v174 = vsel %vm172, %v170, 0
    %v177 = vsel %vm172, %v171, 0
    %179 = vmatprep.subr.bf16.mxu0 0
    %180 = vmatpush1.bf16.msra.mxu0 %v132
    %181 = vmatprep.subr.bf16.mxu0 0
    %182 = vmatpush1.bf16.msra.mxu0 %v133
    %183 = vmatprep.subr.bf16.mxu0 0
    %184 = vmatpush1.bf16.msra.mxu0 0
    %185 = vmatprep.subr.bf16.mxu0 0
    %186 = vmatpush1.bf16.msra.mxu0 0
    %187 = vmatprep.subr.bf16.mxu0 0
    %188 = vmatpush1.bf16.msra.mxu0 0
    %189 = vmatprep.subr.bf16.mxu0 0
    %190 = vmatpush1.bf16.msra.mxu0 0
    %191 = vmatprep.subr.bf16.mxu0 0
    %192 = vmatpush1.bf16.msra.mxu0 0
    %193 = vmatprep.subr.bf16.mxu0 0
    %194 = vmatpush1.bf16.msra.mxu0 0
    %195 = vmatprep.subr.bf16.mxu0 0
    %196 = vmatpush1.bf16.msra.mxu0 0
    %197 = vmatprep.subr.bf16.mxu0 0
    %198 = vmatpush1.bf16.msra.mxu0 0
    %199 = vmatprep.subr.bf16.mxu0 0
    %200 = vmatpush1.bf16.msra.mxu0 0
    %201 = vmatprep.subr.bf16.mxu0 0
    %202 = vmatpush1.bf16.msra.mxu0 0
    %203 = vmatprep.subr.bf16.mxu0 0
    %204 = vmatpush1.bf16.msra.mxu0 0
    %205 = vmatprep.subr.bf16.mxu0 0
    %206 = vmatpush1.bf16.msra.mxu0 0
    %207 = vmatprep.subr.bf16.mxu0 0
    %208 = vmatpush1.bf16.msra.mxu0 0
    %209 = vmatprep.subr.bf16.mxu0 0
    %210 = vmatpush1.bf16.msra.mxu0 0
    %211 = vmatprep.mubr.bf16.mxu0 0
    %212 = vmatmul.mubr.bf16.gmra.mrb[0].mxu0 %v174
    %v213 = vpop.f32.mrb[0].mxu0
    %v214 = vadd.f32 %v145, %v213
    %v215 = vpop.f32.mrb[0].mxu0
    %v216 = vpop.f32.mrb[0].mxu0
    %v217 = vadd.f32 %v150, %v216
    %v218 = vpop.f32.mrb[0].mxu0
    %219 = vmatprep.mubr.bf16.mxu0 0
    %220 = vmatmul.mubr.bf16.gmra.mrb[0].mxu0 %v177
    %v221 = vpop.f32.mrb[0].mxu0
    %v222 = vadd.f32 %v155, %v221
    %v223 = vpop.f32.mrb[0].mxu0
    %v224 = vpop.f32.mrb[0].mxu0
    %v225 = vadd.f32 %v160, %v224
    %v226 = vpop.f32.mrb[0].mxu0
    %227 = vdwg.mxu0
    %v228 = vtanh.pop %v214
    %v229 = vtanh.pop %v217
    %v230 = vtanh.pop %v222
    %v231 = vtanh.pop %v225
    %v232 = vld [vmem:[%s5] sm:$0xff]
    %v233 = vld [vmem:[%s5 + $0x8] sm:$0xff]
    %v234 = vld [vmem:[%s5 + $0x10] sm:$0xff]
    %v235 = vld [vmem:[%s5 + $0x18] sm:$0xff]
    %237 = vset.pattern.permute.xlu0 0
    %238 = vperm.xlu0 %237, %v232
    %v239 = vpop.permute.xlu0 %238
    %242 = vset.pattern.permute.xlu0 0
    %243 = vperm.xlu0 %242, %v233
    %v244 = vpop.permute.xlu0 %243
    %247 = vset.pattern.permute.xlu0 0
    %248 = vperm.xlu0 %247, %v234
    %v249 = vpop.permute.xlu0 %248
    %252 = vset.pattern.permute.xlu0 0
    %253 = vperm.xlu0 %252, %v235
    %v254 = vpop.permute.xlu0 %253
    %v256 = vmul.f32 %v228, %v239
    %v257 = vmul.f32 %v229, %v244
    %v258 = vmul.f32 %v230, %v249
    %v259 = vmul.f32 %v231, %v254
    %vm260 = vcmask 64512
    %v261 = vsel %vm260, %v256, 0.0
    %v262 = vsel %vm260, %v257, 0.0
    %v263 = vadd.f32 %v261, %v262
    %v264 = vsel %vm260, %v258, 0.0
    %v265 = vadd.f32 %v263, %v264
    %v266 = vsel %vm260, %v259, 0.0
    %v267 = vadd.f32 %v265, %v266
    %v268 = vrot.slane %v267, 4
    %v269 = vadd.f32 %v267, %v268
    %v270 = vrot.slane %v269, 2
    %v271 = vadd.f32 %v269, %v270
    %v272 = vrot.slane %v271, 1
    %v273 = vadd.f32 %v271, %v272
    %s274 = sld [smem:[#allocation2]]
    %v275 = vstv %s274
    %v276 = vadd.f32 %v273, %v275
    %vm277 = vcmask 57344
    %278 = vst.msk [vmem:[#allocation3] sm:$0x1] %vm277, %v276
    // Predicated region
    $region30: #{_lambda_.1} parent=1 // pred_check
      _
    $region31: #{_lambda_.1} parent=1 // pred_check_branch
      %280 = sbr.rel (0) target = $region33
    $region32: #{_lambda_.1} parent=1 // pred_region
      %s282 = ssub.s32 16, 16
      %283 = vsyncadd [#allocation4], %s282
      %s285 = sshll.u32 [#allocation3], 4
      %s286 = int_to_ptr.vmem [resolvable:$true] %s285
      %288 = dma.vmem_to_hbm [thread:$0]  %s286, 16, %s7, [#allocation4]
    $region33: #{_lambda_.1} parent=1 // pred_fallthru
      _
    // Predicated region
    $region34: #{_lambda_.1} parent=1 // pred_check
      _
    $region35: #{_lambda_.1} parent=1 // pred_check_branch
      %290 = sbr.rel (0) target = $region37
    $region36: #{_lambda_.1} parent=1 // pred_region
      %291 = dma.done [#allocation4], 16
    $region37: #{_lambda_.1} parent=1 // pred_fallthru
      _
    %292 = vsyncpa [#allocation4], 1

</llo_original>
